<compile_context>
chip_gen: v7x
topology: tpu7x:2x2x1
jax: 0.10.0
libtpu: 0.0.40
codegen_flags: <defaults>
</compile_context>

<pallas_src>
import functools

import jax
import jax.numpy as jnp
from jax.experimental import pallas as pl
from jax.experimental.pallas import tpu as pltpu

_LANE = 128       # vreg lane width (last dim)
_SUBLANE = 8      # vreg sublane count for f32 (second-to-last dim)
_MIB = 1024 * 1024


def _round_up(x, m):
    return ((x + m - 1) // m) * m


def _pick_tile(dim, candidates):
    """Largest candidate that evenly divides `dim`."""
    for c in candidates:
        if dim % c == 0:
            return c
    return dim


def _apply_activation(x, activation):
    if activation == "relu":
        return jnp.maximum(x, 0.0)
    if activation == "tanh":
        return jnp.tanh(x)
    if activation == "sigmoid":
        return jax.nn.sigmoid(x)
    raise ValueError(f"unsupported non_linearity: {activation}")


def _vmem_budget_bytes():
    """Generation-aware scoped-VMEM budget.

    v7x has 64 MiB/TC, v5e/v6e have 128 MiB; cap well below the v7x physical
    size so the same budget compiles on all three generations while still
    being far above the 16/32 MiB default scoped limits.
    """
    try:
        cap = pltpu.get_tpu_info().vmem_capacity_bytes
    except Exception:
        cap = 64 * _MIB          # assume the most constrained part (v7x)
    return int(min(cap * 5 // 8, 48 * _MIB))


# ----------------------------------------------------------------------------
# Kernel 1: fused multi-layer MLP (small layers -> all weights resident in VMEM)
# ----------------------------------------------------------------------------
def _fused_mlp_kernel(*refs, n_layers, activation):
    # refs = (x_ref, w0, b0, w1, b1, ..., w_{L-1}, b_{L-1}, o_ref)
    x_ref = refs[0]
    o_ref = refs[-1]
    h = x_ref[...]
    for layer in range(n_layers):
        w_ref = refs[1 + 2 * layer]
        b_ref = refs[2 + 2 * layer]
        lhs = h if h.dtype == w_ref.dtype else h.astype(w_ref.dtype)
        acc = jnp.dot(lhs, w_ref[...], preferred_element_type=jnp.float32)
        acc = acc + b_ref[...]                  # bias stored f32 -> no cast
        h = _apply_activation(acc, activation)  # stays f32 between layers
    o_ref[...] = h.astype(o_ref.dtype)


def _pick_fused_tb(m):
    if m < 16:
        return m                      # single step; block == full batch dim
    tb = min(256, _round_up(m, _SUBLANE))
    if pl.cdiv(m, tb) == 1:
        # give megacore (v7x's two TensorCores) at least two parallel steps
        tb = _round_up(pl.cdiv(m, 2), _SUBLANE)
    return tb


def fused_mlp_forward(x, layer_params, out_dim, activation, *, vmem_budget):
    """Whole MLP in one pallas_call, tiled only over batch. x: (M, D_in)."""
    m, k0 = x.shape
    n_layers = len(layer_params)
    np_last = layer_params[-1][0].shape[1]
    tb = _pick_fused_tb(m)
    grid = (pl.cdiv(m, tb),)

    flat_params = []
    for w, b in layer_params:
        flat_params += [w, b]

    flops = sum(2 * m * w.shape[0] * w.shape[1] for w, _ in layer_params)
    trans = (sum(m * w.shape[1] for w, _ in layer_params)
             if activation in ("tanh", "sigmoid") else 0)
    bytes_acc = (x.size * x.dtype.itemsize
                 + sum(w.size * w.dtype.itemsize + b.size * b.dtype.itemsize
                       for w, b in layer_params)
                 + m * np_last * x.dtype.itemsize)
    cost = pl.CostEstimate(flops=flops, transcendentals=trans,
                           bytes_accessed=bytes_acc)

    kernel = functools.partial(_fused_mlp_kernel, n_layers=n_layers,
                               activation=activation)

    def _call(single_buffer_weights):
        in_specs = [pl.BlockSpec((tb, k0), lambda i: (i, 0))]
        for w, b in layer_params:
            if single_buffer_weights:
                # grid-invariant blocks: fetched once, single buffer halves
                # their resident VMEM footprint
                in_specs.append(pl.BlockSpec(w.shape, lambda i: (0, 0),
                                             pipeline_mode=pl.Buffered(1)))
                in_specs.append(pl.BlockSpec(b.shape, lambda i: (0, 0),
                                             pipeline_mode=pl.Buffered(1)))
            else:
                in_specs.append(pl.BlockSpec(w.shape, lambda i: (0, 0)))
                in_specs.append(pl.BlockSpec(b.shape, lambda i: (0, 0)))
        return pl.pallas_call(
            kernel,
            out_shape=jax.ShapeDtypeStruct((m, np_last), x.dtype),
            grid=grid,
            in_specs=in_specs,
            out_specs=pl.BlockSpec((tb, np_last), lambda i: (i, 0)),
            compiler_params=pltpu.CompilerParams(
                dimension_semantics=("parallel",),
                vmem_limit_bytes=vmem_budget),
            cost_estimate=cost,
        )(x, *flat_params)

    try:
        out = _call(True)
    except Exception:
        # installed JAX/Mosaic rejected pl.Buffered(1); use default buffering
        out = _call(False)

    return out[:, :out_dim]


# ----------------------------------------------------------------------------
# Kernel 2: single layer, tiled (M, N, K) matmul with VMEM f32 accumulator
# ----------------------------------------------------------------------------
def _linear_act_kernel(x_ref, w_ref, b_ref, o_ref, acc_ref, *, activation):
    k = pl.program_id(2)

    @pl.when(k == 0)
    def _init():
        acc_ref[...] = jnp.zeros_like(acc_ref)

    lhs = x_ref[...]
    if lhs.dtype != w_ref.dtype:
        lhs = lhs.astype(w_ref.dtype)
    acc_ref[...] += jnp.dot(lhs, w_ref[...], preferred_element_type=jnp.float32)

    @pl.when(k == pl.num_programs(2) - 1)
    def _finalize():
        out = acc_ref[...] + b_ref[...]          # bias stored f32
        o_ref[...] = _apply_activation(out, activation).astype(o_ref.dtype)


def _pick_tm(m):
    if m < 128:
        return m                      # block == full batch dim (always legal)
    for c in (512, 256, 128):
        # big tiles cut w_t re-reads / grid overhead, but avoid ballooning
        # the padded batch for awkward sizes
        if c <= m and (_round_up(m, c) - m) <= c // 2:
            return c
    return 128


def linear_act_tiled(x, w_t, b, activation, *, tm, vmem_budget):
    """y = act(x @ w_t + b).

    x:   (M, Kp)    batch-unpadded (partial last M block handled by Pallas)
    w_t: (Kp, Np)   pre-transposed; Np multiple of 128
    b:   (1, Np)    float32
    Returns (M, Np) in w_t.dtype (lane-padded columns sliced by the caller).
    """
    m, kp = x.shape
    kp2, np_ = w_t.shape
    assert kp == kp2

    tn = _pick_tile(np_, (512, 256, 128))
    tk = _pick_tile(kp, (1024, 512, 256, 128)) if kp % _LANE == 0 else kp
    grid = (pl.cdiv(m, tm), np_ // tn, kp // tk)

    cost = pl.CostEstimate(
        flops=2 * m * np_ * kp,
        transcendentals=m * np_ if activation in ("tanh", "sigmoid") else 0,
        bytes_accessed=(m * kp * x.dtype.itemsize
                        + kp * np_ * w_t.dtype.itemsize
                        + np_ * b.dtype.itemsize
                        + m * np_ * w_t.dtype.itemsize),
    )

    kernel = functools.partial(_linear_act_kernel, activation=activation)
    return pl.pallas_call(
        kernel,
        out_shape=jax.ShapeDtypeStruct((m, np_), w_t.dtype),
        grid=grid,
        in_specs=[
            pl.BlockSpec((tm, tk), lambda i, j, k: (i, k)),
            pl.BlockSpec((tk, tn), lambda i, j, k: (k, j)),
            pl.BlockSpec((1, tn), lambda i, j, k: (0, j)),
        ],
        out_specs=pl.BlockSpec((tm, tn), lambda i, j, k: (i, j)),
        scratch_shapes=[pltpu.VMEM((tm, tn), jnp.float32)],
        compiler_params=pltpu.CompilerParams(
            dimension_semantics=("parallel", "parallel", "arbitrary"),
            vmem_limit_bytes=vmem_budget),
        cost_estimate=cost,
    )(x, w_t, b)


# ----------------------------------------------------------------------------
# Module wrapper
# ----------------------------------------------------------------------------
class BasicMLPPallas:
    """JAX/Pallas port of BasicMLP.

    Each block is Dropout (identity at inference) -> Linear -> non-linearity,
    over hidden_dims + [output_dim] layers, as in the PyTorch module.
    """

    def __init__(self, input_dim, output_dim, hidden_dims=(), dropout=0.5,
                 non_linearities="relu", key=None, param_dtype=jnp.bfloat16):
        self.non_linearities = non_linearities
        self.dims = [input_dim] + list(hidden_dims) + [output_dim]
        self.param_dtype = param_dtype
        self.dropout = dropout                 # identity at inference
        self.vmem_budget = _vmem_budget_bytes()
        key = jax.random.PRNGKey(0) if key is None else key

        self.params = []        # PyTorch-layout (D_out, D_in) f32 (reference)
        self.layer_params = []  # (w_t (K_in, D_out_pad) param_dtype, b (1, D_out_pad) f32)
        prev_width = input_dim  # width of the activation entering this layer
        for i in range(1, len(self.dims)):
            d_in, d_out = self.dims[i - 1], self.dims[i]
            key, wk, bk = jax.random.split(key, 3)
            # deterministic small init (stand-in for init_weights)
            w = jax.random.normal(wk, (d_out, d_in), jnp.float32) / jnp.sqrt(d_in)
            b = jax.random.normal(bk, (d_out,), jnp.float32) * 0.01
            self.params.append((w, b))

            d_out_p = _round_up(d_out, _LANE)
            # Layer 0 keeps the true input width (x needs no lane pad); deeper
            # layers pad their input dim to the previous layer's padded width
            # with zero rows, so padded activation lanes contribute nothing.
            w_t = (jnp.zeros((prev_width, d_out_p), self.param_dtype)
                   .at[:d_in, :d_out].set(w.T.astype(self.param_dtype)))
            b_p = jnp.zeros((1, d_out_p), jnp.float32).at[0, :d_out].set(b)
            self.layer_params.append((w_t, b_p))
            prev_width = d_out_p

    # ----- path selection ---------------------------------------------------
    def _use_fused(self, batch):
        tb = _pick_fused_tb(batch)
        pbytes = sum(w.size * w.dtype.itemsize + b.size * b.dtype.itemsize
                     for w, b in self.layer_params)
        # per-layer f32 intermediate activations + double-buffered in/out blocks
        act_bytes = sum(4 * tb * w.shape[1] for w, _ in self.layer_params)
        io_bytes = 2 * 4 * tb * (self.layer_params[0][0].shape[0]
                                 + self.layer_params[-1][0].shape[1])
        # assume double-buffered weights (worst case if pl.Buffered(1) is
        # unavailable) plus compiler-scratch headroom
        need = 2 * pbytes + act_bytes + io_bytes + 2 * _MIB
        return need < self.vmem_budget

    # ----- forward ------------------------------------------------------------
    def __call__(self, x):
        # Dropout -> identity (inference mode).
        if self._use_fused(x.shape[0]):
            return fused_mlp_forward(x, self.layer_params, self.dims[-1],
                                     self.non_linearities,
                                     vmem_budget=self.vmem_budget)
        return self._layered_forward(x)

    def _layered_forward(self, x):
        """Per-layer tiled path for layers too big to keep resident in VMEM."""
        m = x.shape[0]
        tm = _pick_tm(m)
        h = x
        for w_t, b_p in self.layer_params:
            # padded lanes stay harmless: the matching weight rows are zero
            h = linear_act_tiled(h, w_t, b_p, self.non_linearities,
                                 tm=tm, vmem_budget=self.vmem_budget)
        return h[:, :self.dims[-1]].astype(x.dtype)


if __name__ == "__main__":
    key = jax.random.PRNGKey(0)
    batch, input_dim, hidden, output_dim = 8, 32, 64, 16

    kx, kp = jax.random.split(key)
    x = jax.random.normal(kx, (batch, input_dim), jnp.float32)

    # exact-precision model (f32 storage) -> tight check against the reference
    model32 = BasicMLPPallas(input_dim, output_dim, hidden_dims=[hidden],
                             dropout=0.5, non_linearities="relu", key=kp,
                             param_dtype=jnp.float32)
    y = jax.block_until_ready(model32(x))            # fused single-call path
    ref = x
    for w, b in model32.params:                      # plain-JAX reference
        ref = jnp.maximum(ref @ w.T + b, 0.0)
    assert y.shape == (batch, output_dim)
    assert jnp.allclose(y, ref, atol=1e-5, rtol=1e-5)

    y2 = jax.block_until_ready(model32._layered_forward(x))  # tiled fallback
    assert jnp.allclose(y2, ref, atol=1e-5, rtol=1e-5)

    # default bf16-weight model (halved HBM/VMEM traffic) -> relaxed tolerance
    model_bf = BasicMLPPallas(input_dim, output_dim, hidden_dims=[hidden],
                              non_linearities="sigmoid", key=kp)
    ys = jax.block_until_ready(model_bf(x))
    ref_s = x
    for w, b in model_bf.params:
        ref_s = jax.nn.sigmoid(ref_s @ w.T + b)
    assert jnp.allclose(ys, ref_s, atol=3e-2, rtol=3e-2)

    yl = jax.block_until_ready(model_bf._layered_forward(x))
    assert jnp.allclose(yl, ref_s, atol=3e-2, rtol=3e-2)

    print("KERNEL_OK")
</pallas_src>

<mosaic_0001>
module attributes {stable_mosaic.version = 11 : i64} {
  func.func @_fused_mlp_kernel(%arg0: i32, %arg1: memref<8x32xf32, #tpu.memory_space<vmem>>, %arg2: memref<32x128xf32, #tpu.memory_space<vmem>>, %arg3: memref<1x128xf32, #tpu.memory_space<vmem>>, %arg4: memref<128x128xf32, #tpu.memory_space<vmem>>, %arg5: memref<1x128xf32, #tpu.memory_space<vmem>>, %arg6: memref<8x128xf32, #tpu.memory_space<vmem>>) attributes {dimension_semantics = [#tpu.dimension_semantics<parallel>], iteration_bounds = array<i64: 1>, scalar_prefetch = 0 : i64, scratch_operands = 0 : i64, tpu.core_type = #tpu.core_type<tc>, window_params = [{transform_indices = @transform_0, window_bounds = array<i64: 8, 32>}, {pipeline_mode = #tpu.pipeline_mode<synchronous>, transform_indices = @transform_1, window_bounds = array<i64: 32, 128>}, {pipeline_mode = #tpu.pipeline_mode<synchronous>, transform_indices = @transform_2, window_bounds = array<i64: 1, 128>}, {pipeline_mode = #tpu.pipeline_mode<synchronous>, transform_indices = @transform_3, window_bounds = array<i64: 128, 128>}, {pipeline_mode = #tpu.pipeline_mode<synchronous>, transform_indices = @transform_4, window_bounds = array<i64: 1, 128>}, {transform_indices = @transform_5, window_bounds = array<i64: 8, 128>}]} {
    %c0 = arith.constant 0 : index
    %c0_0 = arith.constant 0 : index
    %0 = vector.load %arg1[%c0, %c0_0] : memref<8x32xf32, #tpu.memory_space<vmem>>, vector<8x32xf32>
    %c0_1 = arith.constant 0 : index
    %c0_2 = arith.constant 0 : index
    %1 = vector.load %arg2[%c0_1, %c0_2] : memref<32x128xf32, #tpu.memory_space<vmem>>, vector<32x128xf32>
    %cst = arith.constant dense<0.000000e+00> : vector<8x128xf32>
    %2 = tpu.matmul %0, %1, %cst {dimension_numbers = #tpu.dot_dimension_numbers<[1], [0], [0], [1], [0, 0, 1, 1], [], []>} : vector<8x32xf32>, vector<32x128xf32>, vector<8x128xf32> -> vector<8x128xf32>
    %c0_3 = arith.constant 0 : index
    %c0_4 = arith.constant 0 : index
    %3 = vector.load %arg3[%c0_3, %c0_4] : memref<1x128xf32, #tpu.memory_space<vmem>>, vector<1x128xf32>
    %4 = vector.broadcast %3 : vector<1x128xf32> to vector<8x128xf32>
    %5 = arith.addf %2, %4 : vector<8x128xf32>
    %cst_5 = arith.constant 0.000000e+00 : f32
    %6 = vector.broadcast %cst_5 : f32 to vector<8x128xf32>
    %7 = arith.maximumf %5, %6 : vector<8x128xf32>
    %c0_6 = arith.constant 0 : index
    %c0_7 = arith.constant 0 : index
    %8 = vector.load %arg4[%c0_6, %c0_7] : memref<128x128xf32, #tpu.memory_space<vmem>>, vector<128x128xf32>
    %cst_8 = arith.constant dense<0.000000e+00> : vector<8x128xf32>
    %9 = tpu.matmul %7, %8, %cst_8 {dimension_numbers = #tpu.dot_dimension_numbers<[1], [0], [0], [1], [0, 0, 1, 1], [], []>} : vector<8x128xf32>, vector<128x128xf32>, vector<8x128xf32> -> vector<8x128xf32>
    %c0_9 = arith.constant 0 : index
    %c0_10 = arith.constant 0 : index
    %10 = vector.load %arg5[%c0_9, %c0_10] : memref<1x128xf32, #tpu.memory_space<vmem>>, vector<1x128xf32>
    %11 = vector.broadcast %10 : vector<1x128xf32> to vector<8x128xf32>
    %12 = arith.addf %9, %11 : vector<8x128xf32>
    %cst_11 = arith.constant 0.000000e+00 : f32
    %13 = vector.broadcast %cst_11 : f32 to vector<8x128xf32>
    %14 = arith.maximumf %12, %13 : vector<8x128xf32>
    %c0_12 = arith.constant 0 : index
    %c0_13 = arith.constant 0 : index
    %15 = vector.load %arg6[%c0_12, %c0_13] : memref<8x128xf32, #tpu.memory_space<vmem>>, vector<8x128xf32>
    tpu.vector_store %arg6[%c0_12, %c0_13], %14 {strides = array<i32>} : memref<8x128xf32, #tpu.memory_space<vmem>>, vector<8x128xf32>,
    return
  }
  func.func @transform_0(%arg0: i32) -> (i32, i32) {
    %c0_i32 = arith.constant 0 : i32
    %c0_i32_0 = arith.constant 0 : i32
    return %arg0, %c0_i32 : i32, i32
  }
  func.func @transform_1(%arg0: i32) -> (i32, i32) {
    %c0_i32 = arith.constant 0 : i32
    %c0_i32_0 = arith.constant 0 : i32
    %c0_i32_1 = arith.constant 0 : i32
    return %c0_i32, %c0_i32_0 : i32, i32
  }
  func.func @transform_2(%arg0: i32) -> (i32, i32) {
    %c0_i32 = arith.constant 0 : i32
    %c0_i32_0 = arith.constant 0 : i32
    %c0_i32_1 = arith.constant 0 : i32
    return %c0_i32, %c0_i32_0 : i32, i32
  }
  func.func @transform_3(%arg0: i32) -> (i32, i32) {
    %c0_i32 = arith.constant 0 : i32
    %c0_i32_0 = arith.constant 0 : i32
    %c0_i32_1 = arith.constant 0 : i32
    return %c0_i32, %c0_i32_0 : i32, i32
  }
  func.func @transform_4(%arg0: i32) -> (i32, i32) {
    %c0_i32 = arith.constant 0 : i32
    %c0_i32_0 = arith.constant 0 : i32
    %c0_i32_1 = arith.constant 0 : i32
    return %c0_i32, %c0_i32_0 : i32, i32
  }
  func.func @transform_5(%arg0: i32) -> (i32, i32) {
    %c0_i32 = arith.constant 0 : i32
    %c0_i32_0 = arith.constant 0 : i32
    return %arg0, %c0_i32 : i32, i32
  }
}

module attributes {stable_mosaic.version = 11 : i64} {
  func.func @_fused_mlp_kernel(%arg0: i32, %arg1: memref<8x32xf32, #tpu.memory_space<vmem>>, %arg2: memref<32x128xf32, #tpu.memory_space<vmem>>, %arg3: memref<1x128xf32, #tpu.memory_space<vmem>>, %arg4: memref<128x128xf32, #tpu.memory_space<vmem>>, %arg5: memref<1x128xf32, #tpu.memory_space<vmem>>, %arg6: memref<8x128xf32, #tpu.memory_space<vmem>>) attributes {dimension_semantics = [#tpu.dimension_semantics<parallel>], iteration_bounds = array<i64: 1>, scalar_prefetch = 0 : i64, scratch_operands = 0 : i64, tpu.core_type = #tpu.core_type<tc>, window_params = [{transform_indices = @transform_0, window_bounds = array<i64: 8, 32>}, {pipeline_mode = #tpu.pipeline_mode<synchronous>, transform_indices = @transform_1, window_bounds = array<i64: 32, 128>}, {pipeline_mode = #tpu.pipeline_mode<synchronous>, transform_indices = @transform_2, window_bounds = array<i64: 1, 128>}, {pipeline_mode = #tpu.pipeline_mode<synchronous>, transform_indices = @transform_3, window_bounds = array<i64: 128, 128>}, {pipeline_mode = #tpu.pipeline_mode<synchronous>, transform_indices = @transform_4, window_bounds = array<i64: 1, 128>}, {transform_indices = @transform_5, window_bounds = array<i64: 8, 128>}]} {
    %c0 = arith.constant 0 : index
    %c0_0 = arith.constant 0 : index
    %0 = vector.load %arg1[%c0, %c0_0] : memref<8x32xf32, #tpu.memory_space<vmem>>, vector<8x32xf32>
    %c0_1 = arith.constant 0 : index
    %c0_2 = arith.constant 0 : index
    %1 = vector.load %arg2[%c0_1, %c0_2] : memref<32x128xf32, #tpu.memory_space<vmem>>, vector<32x128xf32>
    %cst = arith.constant dense<0.000000e+00> : vector<8x128xf32>
    %2 = tpu.matmul %0, %1, %cst {dimension_numbers = #tpu.dot_dimension_numbers<[1], [0], [0], [1], [0, 0, 1, 1], [], []>} : vector<8x32xf32>, vector<32x128xf32>, vector<8x128xf32> -> vector<8x128xf32>
    %c0_3 = arith.constant 0 : index
    %c0_4 = arith.constant 0 : index
    %3 = vector.load %arg3[%c0_3, %c0_4] : memref<1x128xf32, #tpu.memory_space<vmem>>, vector<1x128xf32>
    %4 = vector.broadcast %3 : vector<1x128xf32> to vector<8x128xf32>
    %5 = arith.addf %2, %4 : vector<8x128xf32>
    %cst_5 = arith.constant 0.000000e+00 : f32
    %6 = vector.broadcast %cst_5 : f32 to vector<8x128xf32>
    %7 = arith.maximumf %5, %6 : vector<8x128xf32>
    %c0_6 = arith.constant 0 : index
    %c0_7 = arith.constant 0 : index
    %8 = vector.load %arg4[%c0_6, %c0_7] : memref<128x128xf32, #tpu.memory_space<vmem>>, vector<128x128xf32>
    %cst_8 = arith.constant dense<0.000000e+00> : vector<8x128xf32>
    %9 = tpu.matmul %7, %8, %cst_8 {dimension_numbers = #tpu.dot_dimension_numbers<[1], [0], [0], [1], [0, 0, 1, 1], [], []>} : vector<8x128xf32>, vector<128x128xf32>, vector<8x128xf32> -> vector<8x128xf32>
    %c0_9 = arith.constant 0 : index
    %c0_10 = arith.constant 0 : index
    %10 = vector.load %arg5[%c0_9, %c0_10] : memref<1x128xf32, #tpu.memory_space<vmem>>, vector<1x128xf32>
    %11 = vector.broadcast %10 : vector<1x128xf32> to vector<8x128xf32>
    %12 = arith.addf %9, %11 : vector<8x128xf32>
    %cst_11 = arith.constant 0.000000e+00 : f32
    %13 = vector.broadcast %cst_11 : f32 to vector<8x128xf32>
    %14 = arith.maximumf %12, %13 : vector<8x128xf32>
    %c0_12 = arith.constant 0 : index
    %c0_13 = arith.constant 0 : index
    %15 = vector.load %arg6[%c0_12, %c0_13] : memref<8x128xf32, #tpu.memory_space<vmem>>, vector<8x128xf32>
    tpu.vector_store %arg6[%c0_12, %c0_13], %14 {strides = array<i32>} : memref<8x128xf32, #tpu.memory_space<vmem>>, vector<8x128xf32>,
    return
  }
  func.func @transform_0(%arg0: i32) -> (i32, i32) {
    %c0_i32 = arith.constant 0 : i32
    %c0_i32_0 = arith.constant 0 : i32
    return %arg0, %c0_i32 : i32, i32
  }
  func.func @transform_1(%arg0: i32) -> (i32, i32) {
    %c0_i32 = arith.constant 0 : i32
    %c0_i32_0 = arith.constant 0 : i32
    %c0_i32_1 = arith.constant 0 : i32
    return %c0_i32, %c0_i32_0 : i32, i32
  }
  func.func @transform_2(%arg0: i32) -> (i32, i32) {
    %c0_i32 = arith.constant 0 : i32
    %c0_i32_0 = arith.constant 0 : i32
    %c0_i32_1 = arith.constant 0 : i32
    return %c0_i32, %c0_i32_0 : i32, i32
  }
  func.func @transform_3(%arg0: i32) -> (i32, i32) {
    %c0_i32 = arith.constant 0 : i32
    %c0_i32_0 = arith.constant 0 : i32
    %c0_i32_1 = arith.constant 0 : i32
    return %c0_i32, %c0_i32_0 : i32, i32
  }
  func.func @transform_4(%arg0: i32) -> (i32, i32) {
    %c0_i32 = arith.constant 0 : i32
    %c0_i32_0 = arith.constant 0 : i32
    %c0_i32_1 = arith.constant 0 : i32
    return %c0_i32, %c0_i32_0 : i32, i32
  }
  func.func @transform_5(%arg0: i32) -> (i32, i32) {
    %c0_i32 = arith.constant 0 : i32
    %c0_i32_0 = arith.constant 0 : i32
    return %arg0, %c0_i32 : i32, i32
  }
}

</mosaic_0001>

<llo_original>
// kernel: tpu_custom_call.1
$region0: #{tpu_custom_call.1}
  #allocation0 [shape = 'u32[]', space=smem, size = 0x4, offset = 0x4, fixed_abs, tag = 'smem constant byte address 0x4 - core index']
  #allocation1 [shape = 'u32[144,128]{1,0:T(1,128)}', space=vmem, size = 0x12000, scoped, tag = 'internal scratch']
  %s0 = inlined_call_operand.hbm [shape: f32[8,32], index: 0, kind: input, shape index: {}]
  %s1 = inlined_call_operand.hbm [shape: f32[32,128], index: 1, kind: input, shape index: {}]
  %s2 = inlined_call_operand.vmem [shape: f32[1,128], index: 2, kind: input, shape index: {}]
  %s3 = inlined_call_operand.hbm [shape: f32[128,128], index: 3, kind: input, shape index: {}]
  %s4 = inlined_call_operand.vmem [shape: f32[1,128], index: 4, kind: input, shape index: {}]
  %s5 = inlined_call_operand.hbm [shape: f32[8,128], index: 5, kind: output, shape index: {}]
  %s6 = sld [smem:[#allocation0]]
  $region42: #{tpu_custom_call.1} parent=0
    _
  %s8 = ssub.s32 1, %s6
  %s9 = scalar_select 0, %s8, %s6
  $region1: #{tpu_custom_call.1} parent=0
    #allocation2 [shape = 'u8[4096]{0}', space=vmem, size = 0x1000, scoped, tag = 'input window, operand 0, single buffered']
    #allocation3 [shape = 's32[1]{0}', space=sflag, size = 0x4, scoped, tag = 'scoped memory for tpu_custom_call.1']
    #allocation4 [shape = 's32[1]{0}', space=sflag, size = 0x4, scoped, tag = 'scoped memory for tpu_custom_call.1']
    #allocation5 [shape = 'u8[16384]{0}', space=vmem, size = 0x4000, scoped, tag = 'input window, operand 1, single buffered']
    #allocation6 [shape = 's32[1]{0}', space=sflag, size = 0x4, scoped, tag = 'scoped memory for tpu_custom_call.1']
    #allocation7 [shape = 'u8[65536]{0}', space=vmem, size = 0x10000, scoped, tag = 'input window, operand 3, single buffered']
    #allocation8 [shape = 'u8[4096]{0}', space=vmem, size = 0x1000, scoped, tag = 'output window, operand 0, single buffered']
    %10 = vsyncpa [#allocation3], 0
    %11 = vsyncpa [#allocation6], 0
    %12 = vsyncpa [#allocation4], 0
    // Predicated region
    $region2: #{tpu_custom_call.1} parent=1 // pred_check
      _
    $region3: #{tpu_custom_call.1} parent=1 // pred_check_branch
      %14 = sbr.rel (0) target = $region5
    $region4: #{tpu_custom_call.1} parent=1 // pred_region
      %s16 = ssub.s32 128, 128
      %17 = vsyncadd [#allocation3], %s16
      %s19 = sshll.u32 [#allocation2], 4
      %s20 = int_to_ptr.vmem [resolvable:$true] %s19
      %22 = dma.hbm_to_vmem [thread:$0]  %s0, 128, %s20, [#allocation3]
    $region5: #{tpu_custom_call.1} parent=1 // pred_fallthru
      _
    // Predicated region
    $region6: #{tpu_custom_call.1} parent=1 // pred_check
      _
    $region7: #{tpu_custom_call.1} parent=1 // pred_check_branch
      %24 = sbr.rel (0) target = $region9
    $region8: #{tpu_custom_call.1} parent=1 // pred_region
      %s26 = ssub.s32 512, 512
      %27 = vsyncadd [#allocation6], %s26
      %s28 = sshll.u32 [#allocation5], 4
      %s29 = int_to_ptr.vmem [resolvable:$true] %s28
      %34 = dma.hbm_to_vmem [thread:$0]  %s1, 512, %s29, [#allocation6], 128, 128, 8
    $region9: #{tpu_custom_call.1} parent=1 // pred_fallthru
      _
    // Predicated region
    $region10: #{tpu_custom_call.1} parent=1 // pred_check
      _
    $region11: #{tpu_custom_call.1} parent=1 // pred_check_branch
      %36 = sbr.rel (0) target = $region13
    $region12: #{tpu_custom_call.1} parent=1 // pred_region
      _
    $region13: #{tpu_custom_call.1} parent=1 // pred_fallthru
      _
    // Predicated region
    $region14: #{tpu_custom_call.1} parent=1 // pred_check
      _
    $region15: #{tpu_custom_call.1} parent=1 // pred_check_branch
      %38 = sbr.rel (0) target = $region17
    $region16: #{tpu_custom_call.1} parent=1 // pred_region
      %s40 = ssub.s32 2048, 2048
      %41 = vsyncadd [#allocation6], %s40
      %s42 = sshll.u32 [#allocation7], 4
      %s43 = int_to_ptr.vmem [resolvable:$true] %s42
      %48 = dma.hbm_to_vmem [thread:$0]  %s3, 2048, %s43, [#allocation6], 128, 128, 8
    $region17: #{tpu_custom_call.1} parent=1 // pred_fallthru
      _
    // Predicated region
    $region18: #{tpu_custom_call.1} parent=1 // pred_check
      _
    $region19: #{tpu_custom_call.1} parent=1 // pred_check_branch
      %50 = sbr.rel (0) target = $region21
    $region20: #{tpu_custom_call.1} parent=1 // pred_region
      _
    $region21: #{tpu_custom_call.1} parent=1 // pred_fallthru
      _
    // Predicated region
    $region22: #{tpu_custom_call.1} parent=1 // pred_check
      _
    $region23: #{tpu_custom_call.1} parent=1 // pred_check_branch
      %52 = sbr.rel (0) target = $region25
    $region24: #{tpu_custom_call.1} parent=1 // pred_region
      %53 = dma.done [#allocation3], 128
    $region25: #{tpu_custom_call.1} parent=1 // pred_fallthru
      _
    // Predicated region
    $region26: #{tpu_custom_call.1} parent=1 // pred_check
      _
    $region27: #{tpu_custom_call.1} parent=1 // pred_check_branch
      %55 = sbr.rel (0) target = $region29
    $region28: #{tpu_custom_call.1} parent=1 // pred_region
      %56 = dma.done [#allocation6], 512
    $region29: #{tpu_custom_call.1} parent=1 // pred_fallthru
      _
    // Predicated region
    $region30: #{tpu_custom_call.1} parent=1 // pred_check
      _
    $region31: #{tpu_custom_call.1} parent=1 // pred_check_branch
      %58 = sbr.rel (0) target = $region33
    $region32: #{tpu_custom_call.1} parent=1 // pred_region
      %59 = dma.done [#allocation6], 2048
    $region33: #{tpu_custom_call.1} parent=1 // pred_fallthru
      _
    %v60 = vld [vmem:[#allocation2] sm:$0xff]
    %v61 = vld [vmem:[#allocation5] sm:$0xff]
    %v62 = vld [vmem:[#allocation5 + $0x8] sm:$0xff]
    %v63 = vld [vmem:[#allocation5 + $0x10] sm:$0xff]
    %v64 = vld [vmem:[#allocation5 + $0x18] sm:$0xff]
    %v65 = vld [vmem:[%s2] sm:$0x1]
    %v67 = vlaneseq
    %v68 = vshrl.u32 %v67, 7
    %v69 = vsub.s32 0, %v68
    %v70 = vrot.slane %v65, %v69
    %vm72 = vcmask 261120
    %v74 = vsel %vm72, %v60, 0
    %76 = vmatprep.subr.mxu0 0.0
    %77 = vmatpush1.msra.mxu0 %v61
    %78 = vmatprep.subr.mxu0 0.0
    %79 = vmatpush1.msra.mxu0 %v62
    %80 = vmatprep.subr.mxu0 0.0
    %81 = vmatpush1.msra.mxu0 %v63
    %82 = vmatprep.subr.mxu0 0.0
    %83 = vmatpush1.msra.mxu0 %v64
    %84 = vmatprep.subr.mxu0 0.0
    %85 = vmatpush1.msra.mxu0 0.0
    %86 = vmatprep.subr.mxu0 0.0
    %87 = vmatpush1.msra.mxu0 0.0
    %88 = vmatprep.subr.mxu0 0.0
    %89 = vmatpush1.msra.mxu0 0.0
    %90 = vmatprep.subr.mxu0 0.0
    %91 = vmatpush1.msra.mxu0 0.0
    %92 = vmatprep.subr.mxu0 0.0
    %93 = vmatpush1.msra.mxu0 0.0
    %94 = vmatprep.subr.mxu0 0.0
    %95 = vmatpush1.msra.mxu0 0.0
    %96 = vmatprep.subr.mxu0 0.0
    %97 = vmatpush1.msra.mxu0 0.0
    %98 = vmatprep.subr.mxu0 0.0
    %99 = vmatpush1.msra.mxu0 0.0
    %100 = vmatprep.subr.mxu0 0.0
    %101 = vmatpush1.msra.mxu0 0.0
    %102 = vmatprep.subr.mxu0 0.0
    %103 = vmatpush1.msra.mxu0 0.0
    %104 = vmatprep.subr.mxu0 0.0
    %105 = vmatpush1.msra.mxu0 0.0
    %106 = vmatprep.subr.mxu0 0.0
    %107 = vmatpush1.msra.mxu0 0.0
    %108 = vmatprep.subr.mxu0 0.0
    %109 = vmatpush1.msra.mxu0 0.0
    %110 = vmatprep.subr.mxu0 0.0
    %111 = vmatpush1.msra.mxu0 0.0
    %112 = vmatprep.subr.mxu0 0.0
    %113 = vmatpush1.msra.mxu0 0.0
    %114 = vmatprep.subr.mxu0 0.0
    %115 = vmatpush1.msra.mxu0 0.0
    %116 = vmatprep.subr.mxu0 0.0
    %117 = vmatpush1.msra.mxu0 0.0
    %118 = vmatprep.subr.mxu0 0.0
    %119 = vmatpush1.msra.mxu0 0.0
    %120 = vmatprep.subr.mxu0 0.0
    %121 = vmatpush1.msra.mxu0 0.0
    %122 = vmatprep.subr.mxu0 0.0
    %123 = vmatpush1.msra.mxu0 0.0
    %124 = vmatprep.subr.mxu0 0.0
    %125 = vmatpush1.msra.mxu0 0.0
    %126 = vmatprep.subr.mxu0 0.0
    %127 = vmatpush1.msra.mxu0 0.0
    %128 = vmatprep.subr.mxu0 0.0
    %129 = vmatpush1.msra.mxu0 0.0
    %130 = vmatprep.subr.mxu0 0.0
    %131 = vmatpush1.msra.mxu0 0.0
    %132 = vmatprep.subr.mxu0 0.0
    %133 = vmatpush1.msra.mxu0 0.0
    %134 = vmatprep.subr.mxu0 0.0
    %135 = vmatpush1.msra.mxu0 0.0
    %136 = vmatprep.subr.mxu0 0.0
    %137 = vmatpush1.msra.mxu0 0.0
    %138 = vmatprep.subr.mxu0 0.0
    %139 = vmatpush1.msra.mxu0 0.0
    %140 = vmatprep.mubr.f32.mxu0 0.0
    %141 = vmatmul.mubr.f32.gmra.mrb[0].mxu0 %v74
    %v142 = vpop.f32.mrb[0].mxu0
    %v143 = vadd.f32 %v70, %v142
    %v144 = vpop.f32.mrb[0].mxu0
    %145 = vdwg.mxu0
    %v146 = vmax.f32 %v143, 0.0
    %v147 = vld [vmem:[#allocation7] sm:$0xff]
    %v148 = vld [vmem:[#allocation7 + $0x8] sm:$0xff]
    %v149 = vld [vmem:[#allocation7 + $0x10] sm:$0xff]
    %v150 = vld [vmem:[#allocation7 + $0x18] sm:$0xff]
    %v151 = vld [vmem:[#allocation7 + $0x20] sm:$0xff]
    %v152 = vld [vmem:[#allocation7 + $0x28] sm:$0xff]
    %v153 = vld [vmem:[#allocation7 + $0x30] sm:$0xff]
    %v154 = vld [vmem:[#allocation7 + $0x38] sm:$0xff]
    %v155 = vld [vmem:[#allocation7 + $0x40] sm:$0xff]
    %v156 = vld [vmem:[#allocation7 + $0x48] sm:$0xff]
    %v157 = vld [vmem:[#allocation7 + $0x50] sm:$0xff]
    %v158 = vld [vmem:[#allocation7 + $0x58] sm:$0xff]
    %v159 = vld [vmem:[#allocation7 + $0x60] sm:$0xff]
    %v160 = vld [vmem:[#allocation7 + $0x68] sm:$0xff]
    %v161 = vld [vmem:[#allocation7 + $0x70] sm:$0xff]
    %v162 = vld [vmem:[#allocation7 + $0x78] sm:$0xff]
    %v163 = vld [vmem:[%s4] sm:$0x1]
    %v165 = vlaneseq
    %v166 = vshrl.u32 %v165, 7
    %v167 = vsub.s32 0, %v166
    %v168 = vrot.slane %v163, %v167
    %170 = vmatprep.subr.mxu0 0.0
    %171 = vmatpush1.msra.mxu0 %v147
    %172 = vmatprep.subr.mxu0 0.0
    %173 = vmatpush1.msra.mxu0 %v148
    %174 = vmatprep.subr.mxu0 0.0
    %175 = vmatpush1.msra.mxu0 %v149
    %176 = vmatprep.subr.mxu0 0.0
    %177 = vmatpush1.msra.mxu0 %v150
    %178 = vmatprep.subr.mxu0 0.0
    %179 = vmatpush1.msra.mxu0 %v151
    %180 = vmatprep.subr.mxu0 0.0
    %181 = vmatpush1.msra.mxu0 %v152
    %182 = vmatprep.subr.mxu0 0.0
    %183 = vmatpush1.msra.mxu0 %v153
    %184 = vmatprep.subr.mxu0 0.0
    %185 = vmatpush1.msra.mxu0 %v154
    %186 = vmatprep.subr.mxu0 0.0
    %187 = vmatpush1.msra.mxu0 %v155
    %188 = vmatprep.subr.mxu0 0.0
    %189 = vmatpush1.msra.mxu0 %v156
    %190 = vmatprep.subr.mxu0 0.0
    %191 = vmatpush1.msra.mxu0 %v157
    %192 = vmatprep.subr.mxu0 0.0
    %193 = vmatpush1.msra.mxu0 %v158
    %194 = vmatprep.subr.mxu0 0.0
    %195 = vmatpush1.msra.mxu0 %v159
    %196 = vmatprep.subr.mxu0 0.0
    %197 = vmatpush1.msra.mxu0 %v160
    %198 = vmatprep.subr.mxu0 0.0
    %199 = vmatpush1.msra.mxu0 %v161
    %200 = vmatprep.subr.mxu0 0.0
    %201 = vmatpush1.msra.mxu0 %v162
    %202 = vmatprep.subr.mxu0 0.0
    %203 = vmatpush1.msra.mxu0 0.0
    %204 = vmatprep.subr.mxu0 0.0
    %205 = vmatpush1.msra.mxu0 0.0
    %206 = vmatprep.subr.mxu0 0.0
    %207 = vmatpush1.msra.mxu0 0.0
    %208 = vmatprep.subr.mxu0 0.0
    %209 = vmatpush1.msra.mxu0 0.0
    %210 = vmatprep.subr.mxu0 0.0
    %211 = vmatpush1.msra.mxu0 0.0
    %212 = vmatprep.subr.mxu0 0.0
    %213 = vmatpush1.msra.mxu0 0.0
    %214 = vmatprep.subr.mxu0 0.0
    %215 = vmatpush1.msra.mxu0 0.0
    %216 = vmatprep.subr.mxu0 0.0
    %217 = vmatpush1.msra.mxu0 0.0
    %218 = vmatprep.subr.mxu0 0.0
    %219 = vmatpush1.msra.mxu0 0.0
    %220 = vmatprep.subr.mxu0 0.0
    %221 = vmatpush1.msra.mxu0 0.0
    %222 = vmatprep.subr.mxu0 0.0
    %223 = vmatpush1.msra.mxu0 0.0
    %224 = vmatprep.subr.mxu0 0.0
    %225 = vmatpush1.msra.mxu0 0.0
    %226 = vmatprep.subr.mxu0 0.0
    %227 = vmatpush1.msra.mxu0 0.0
    %228 = vmatprep.subr.mxu0 0.0
    %229 = vmatpush1.msra.mxu0 0.0
    %230 = vmatprep.subr.mxu0 0.0
    %231 = vmatpush1.msra.mxu0 0.0
    %232 = vmatprep.subr.mxu0 0.0
    %233 = vmatpush1.msra.mxu0 0.0
    %234 = vmatprep.mubr.f32.mxu0 0.0
    %235 = vmatmul.mubr.f32.gmra.mrb[0].mxu0 %v146
    %v236 = vpop.f32.mrb[0].mxu0
    %v237 = vadd.f32 %v168, %v236
    %v238 = vpop.f32.mrb[0].mxu0
    %239 = vdwg.mxu0
    %v240 = vmax.f32 %v237, 0.0
    %241 = vst [vmem:[#allocation8] sm:$0xff] %v240
    // Predicated region
    $region34: #{tpu_custom_call.1} parent=1 // pred_check
      _
    $region35: #{tpu_custom_call.1} parent=1 // pred_check_branch
      %243 = sbr.rel (0) target = $region37
    $region36: #{tpu_custom_call.1} parent=1 // pred_region
      %s245 = ssub.s32 128, 128
      %246 = vsyncadd [#allocation4], %s245
      %s248 = sshll.u32 [#allocation8], 4
      %s249 = int_to_ptr.vmem [resolvable:$true] %s248
      %251 = dma.vmem_to_hbm [thread:$0]  %s249, 128, %s5, [#allocation4]
    $region37: #{tpu_custom_call.1} parent=1 // pred_fallthru
      _
    // Predicated region
    $region38: #{tpu_custom_call.1} parent=1 // pred_check
      _
    $region39: #{tpu_custom_call.1} parent=1 // pred_check_branch
      %253 = sbr.rel (0) target = $region41
    $region40: #{tpu_custom_call.1} parent=1 // pred_region
      %254 = dma.done [#allocation4], 128
    $region41: #{tpu_custom_call.1} parent=1 // pred_fallthru
      _
    %255 = vsyncpa [#allocation3], 1
    %256 = vsyncpa [#allocation6], 1
    %257 = vsyncpa [#allocation4], 1

// kernel: tpu_custom_call.1
$region0: #{tpu_custom_call.1}
  #allocation0 [shape = 'u32[]', space=smem, size = 0x4, offset = 0x4, fixed_abs, tag = 'smem constant byte address 0x4 - core index']
  #allocation1 [shape = 'u32[144,128]{1,0:T(1,128)}', space=vmem, size = 0x12000, scoped, tag = 'internal scratch']
  %s0 = inlined_call_operand.hbm [shape: f32[8,32], index: 0, kind: input, shape index: {}]
  %s1 = inlined_call_operand.hbm [shape: f32[32,128], index: 1, kind: input, shape index: {}]
  %s2 = inlined_call_operand.vmem [shape: f32[1,128], index: 2, kind: input, shape index: {}]
  %s3 = inlined_call_operand.hbm [shape: f32[128,128], index: 3, kind: input, shape index: {}]
  %s4 = inlined_call_operand.vmem [shape: f32[1,128], index: 4, kind: input, shape index: {}]
  %s5 = inlined_call_operand.hbm [shape: f32[8,128], index: 5, kind: output, shape index: {}]
  %s6 = sld [smem:[#allocation0]]
  $region42: #{tpu_custom_call.1} parent=0
    _
  %s8 = ssub.s32 1, %s6
  %s9 = scalar_select 0, %s8, %s6
  $region1: #{tpu_custom_call.1} parent=0
    #allocation2 [shape = 'u8[4096]{0}', space=vmem, size = 0x1000, scoped, tag = 'input window, operand 0, single buffered']
    #allocation3 [shape = 's32[1]{0}', space=sflag, size = 0x4, scoped, tag = 'scoped memory for tpu_custom_call.1']
    #allocation4 [shape = 's32[1]{0}', space=sflag, size = 0x4, scoped, tag = 'scoped memory for tpu_custom_call.1']
    #allocation5 [shape = 'u8[16384]{0}', space=vmem, size = 0x4000, scoped, tag = 'input window, operand 1, single buffered']
    #allocation6 [shape = 's32[1]{0}', space=sflag, size = 0x4, scoped, tag = 'scoped memory for tpu_custom_call.1']
    #allocation7 [shape = 'u8[65536]{0}', space=vmem, size = 0x10000, scoped, tag = 'input window, operand 3, single buffered']
    #allocation8 [shape = 'u8[4096]{0}', space=vmem, size = 0x1000, scoped, tag = 'output window, operand 0, single buffered']
    %10 = vsyncpa [#allocation3], 0
    %11 = vsyncpa [#allocation6], 0
    %12 = vsyncpa [#allocation4], 0
    // Predicated region
    $region2: #{tpu_custom_call.1} parent=1 // pred_check
      _
    $region3: #{tpu_custom_call.1} parent=1 // pred_check_branch
      %14 = sbr.rel (0) target = $region5
    $region4: #{tpu_custom_call.1} parent=1 // pred_region
      %s16 = ssub.s32 128, 128
      %17 = vsyncadd [#allocation3], %s16
      %s19 = sshll.u32 [#allocation2], 4
      %s20 = int_to_ptr.vmem [resolvable:$true] %s19
      %22 = dma.hbm_to_vmem [thread:$0]  %s0, 128, %s20, [#allocation3]
    $region5: #{tpu_custom_call.1} parent=1 // pred_fallthru
      _
    // Predicated region
    $region6: #{tpu_custom_call.1} parent=1 // pred_check
      _
    $region7: #{tpu_custom_call.1} parent=1 // pred_check_branch
      %24 = sbr.rel (0) target = $region9
    $region8: #{tpu_custom_call.1} parent=1 // pred_region
      %s26 = ssub.s32 512, 512
      %27 = vsyncadd [#allocation6], %s26
      %s28 = sshll.u32 [#allocation5], 4
      %s29 = int_to_ptr.vmem [resolvable:$true] %s28
      %34 = dma.hbm_to_vmem [thread:$0]  %s1, 512, %s29, [#allocation6], 128, 128, 8
    $region9: #{tpu_custom_call.1} parent=1 // pred_fallthru
      _
    // Predicated region
    $region10: #{tpu_custom_call.1} parent=1 // pred_check
      _
    $region11: #{tpu_custom_call.1} parent=1 // pred_check_branch
      %36 = sbr.rel (0) target = $region13
    $region12: #{tpu_custom_call.1} parent=1 // pred_region
      _
    $region13: #{tpu_custom_call.1} parent=1 // pred_fallthru
      _
    // Predicated region
    $region14: #{tpu_custom_call.1} parent=1 // pred_check
      _
    $region15: #{tpu_custom_call.1} parent=1 // pred_check_branch
      %38 = sbr.rel (0) target = $region17
    $region16: #{tpu_custom_call.1} parent=1 // pred_region
      %s40 = ssub.s32 2048, 2048
      %41 = vsyncadd [#allocation6], %s40
      %s42 = sshll.u32 [#allocation7], 4
      %s43 = int_to_ptr.vmem [resolvable:$true] %s42
      %48 = dma.hbm_to_vmem [thread:$0]  %s3, 2048, %s43, [#allocation6], 128, 128, 8
    $region17: #{tpu_custom_call.1} parent=1 // pred_fallthru
      _
    // Predicated region
    $region18: #{tpu_custom_call.1} parent=1 // pred_check
      _
    $region19: #{tpu_custom_call.1} parent=1 // pred_check_branch
      %50 = sbr.rel (0) target = $region21
    $region20: #{tpu_custom_call.1} parent=1 // pred_region
      _
    $region21: #{tpu_custom_call.1} parent=1 // pred_fallthru
      _
    // Predicated region
    $region22: #{tpu_custom_call.1} parent=1 // pred_check
      _
    $region23: #{tpu_custom_call.1} parent=1 // pred_check_branch
      %52 = sbr.rel (0) target = $region25
    $region24: #{tpu_custom_call.1} parent=1 // pred_region
      %53 = dma.done [#allocation3], 128
    $region25: #{tpu_custom_call.1} parent=1 // pred_fallthru
      _
    // Predicated region
    $region26: #{tpu_custom_call.1} parent=1 // pred_check
      _
    $region27: #{tpu_custom_call.1} parent=1 // pred_check_branch
      %55 = sbr.rel (0) target = $region29
    $region28: #{tpu_custom_call.1} parent=1 // pred_region
      %56 = dma.done [#allocation6], 512
    $region29: #{tpu_custom_call.1} parent=1 // pred_fallthru
      _
    // Predicated region
    $region30: #{tpu_custom_call.1} parent=1 // pred_check
      _
    $region31: #{tpu_custom_call.1} parent=1 // pred_check_branch
      %58 = sbr.rel (0) target = $region33
    $region32: #{tpu_custom_call.1} parent=1 // pred_region
      %59 = dma.done [#allocation6], 2048
    $region33: #{tpu_custom_call.1} parent=1 // pred_fallthru
      _
    %v60 = vld [vmem:[#allocation2] sm:$0xff]
    %v61 = vld [vmem:[#allocation5] sm:$0xff]
    %v62 = vld [vmem:[#allocation5 + $0x8] sm:$0xff]
    %v63 = vld [vmem:[#allocation5 + $0x10] sm:$0xff]
    %v64 = vld [vmem:[#allocation5 + $0x18] sm:$0xff]
    %v65 = vld [vmem:[%s2] sm:$0x1]
    %v67 = vlaneseq
    %v68 = vshrl.u32 %v67, 7
    %v69 = vsub.s32 0, %v68
    %v70 = vrot.slane %v65, %v69
    %vm72 = vcmask 261120
    %v74 = vsel %vm72, %v60, 0
    %76 = vmatprep.subr.mxu0 0.0
    %77 = vmatpush1.msra.mxu0 %v61
    %78 = vmatprep.subr.mxu0 0.0
    %79 = vmatpush1.msra.mxu0 %v62
    %80 = vmatprep.subr.mxu0 0.0
    %81 = vmatpush1.msra.mxu0 %v63
    %82 = vmatprep.subr.mxu0 0.0
    %83 = vmatpush1.msra.mxu0 %v64
    %84 = vmatprep.subr.mxu0 0.0
    %85 = vmatpush1.msra.mxu0 0.0
    %86 = vmatprep.subr.mxu0 0.0
    %87 = vmatpush1.msra.mxu0 0.0
    %88 = vmatprep.subr.mxu0 0.0
    %89 = vmatpush1.msra.mxu0 0.0
    %90 = vmatprep.subr.mxu0 0.0
    %91 = vmatpush1.msra.mxu0 0.0
    %92 = vmatprep.subr.mxu0 0.0
    %93 = vmatpush1.msra.mxu0 0.0
    %94 = vmatprep.subr.mxu0 0.0
    %95 = vmatpush1.msra.mxu0 0.0
    %96 = vmatprep.subr.mxu0 0.0
    %97 = vmatpush1.msra.mxu0 0.0
    %98 = vmatprep.subr.mxu0 0.0
    %99 = vmatpush1.msra.mxu0 0.0
    %100 = vmatprep.subr.mxu0 0.0
    %101 = vmatpush1.msra.mxu0 0.0
    %102 = vmatprep.subr.mxu0 0.0
    %103 = vmatpush1.msra.mxu0 0.0
    %104 = vmatprep.subr.mxu0 0.0
    %105 = vmatpush1.msra.mxu0 0.0
    %106 = vmatprep.subr.mxu0 0.0
    %107 = vmatpush1.msra.mxu0 0.0
    %108 = vmatprep.subr.mxu0 0.0
    %109 = vmatpush1.msra.mxu0 0.0
    %110 = vmatprep.subr.mxu0 0.0
    %111 = vmatpush1.msra.mxu0 0.0
    %112 = vmatprep.subr.mxu0 0.0
    %113 = vmatpush1.msra.mxu0 0.0
    %114 = vmatprep.subr.mxu0 0.0
    %115 = vmatpush1.msra.mxu0 0.0
    %116 = vmatprep.subr.mxu0 0.0
    %117 = vmatpush1.msra.mxu0 0.0
    %118 = vmatprep.subr.mxu0 0.0
    %119 = vmatpush1.msra.mxu0 0.0
    %120 = vmatprep.subr.mxu0 0.0
    %121 = vmatpush1.msra.mxu0 0.0
    %122 = vmatprep.subr.mxu0 0.0
    %123 = vmatpush1.msra.mxu0 0.0
    %124 = vmatprep.subr.mxu0 0.0
    %125 = vmatpush1.msra.mxu0 0.0
    %126 = vmatprep.subr.mxu0 0.0
    %127 = vmatpush1.msra.mxu0 0.0
    %128 = vmatprep.subr.mxu0 0.0
    %129 = vmatpush1.msra.mxu0 0.0
    %130 = vmatprep.subr.mxu0 0.0
    %131 = vmatpush1.msra.mxu0 0.0
    %132 = vmatprep.subr.mxu0 0.0
    %133 = vmatpush1.msra.mxu0 0.0
    %134 = vmatprep.subr.mxu0 0.0
    %135 = vmatpush1.msra.mxu0 0.0
    %136 = vmatprep.subr.mxu0 0.0
    %137 = vmatpush1.msra.mxu0 0.0
    %138 = vmatprep.subr.mxu0 0.0
    %139 = vmatpush1.msra.mxu0 0.0
    %140 = vmatprep.mubr.f32.mxu0 0.0
    %141 = vmatmul.mubr.f32.gmra.mrb[0].mxu0 %v74
    %v142 = vpop.f32.mrb[0].mxu0
    %v143 = vadd.f32 %v70, %v142
    %v144 = vpop.f32.mrb[0].mxu0
    %145 = vdwg.mxu0
    %v146 = vmax.f32 %v143, 0.0
    %v147 = vld [vmem:[#allocation7] sm:$0xff]
    %v148 = vld [vmem:[#allocation7 + $0x8] sm:$0xff]
    %v149 = vld [vmem:[#allocation7 + $0x10] sm:$0xff]
    %v150 = vld [vmem:[#allocation7 + $0x18] sm:$0xff]
    %v151 = vld [vmem:[#allocation7 + $0x20] sm:$0xff]
    %v152 = vld [vmem:[#allocation7 + $0x28] sm:$0xff]
    %v153 = vld [vmem:[#allocation7 + $0x30] sm:$0xff]
    %v154 = vld [vmem:[#allocation7 + $0x38] sm:$0xff]
    %v155 = vld [vmem:[#allocation7 + $0x40] sm:$0xff]
    %v156 = vld [vmem:[#allocation7 + $0x48] sm:$0xff]
    %v157 = vld [vmem:[#allocation7 + $0x50] sm:$0xff]
    %v158 = vld [vmem:[#allocation7 + $0x58] sm:$0xff]
    %v159 = vld [vmem:[#allocation7 + $0x60] sm:$0xff]
    %v160 = vld [vmem:[#allocation7 + $0x68] sm:$0xff]
    %v161 = vld [vmem:[#allocation7 + $0x70] sm:$0xff]
    %v162 = vld [vmem:[#allocation7 + $0x78] sm:$0xff]
    %v163 = vld [vmem:[%s4] sm:$0x1]
    %v165 = vlaneseq
    %v166 = vshrl.u32 %v165, 7
    %v167 = vsub.s32 0, %v166
    %v168 = vrot.slane %v163, %v167
    %170 = vmatprep.subr.mxu0 0.0
    %171 = vmatpush1.msra.mxu0 %v147
    %172 = vmatprep.subr.mxu0 0.0
    %173 = vmatpush1.msra.mxu0 %v148
    %174 = vmatprep.subr.mxu0 0.0
    %175 = vmatpush1.msra.mxu0 %v149
    %176 = vmatprep.subr.mxu0 0.0
    %177 = vmatpush1.msra.mxu0 %v150
    %178 = vmatprep.subr.mxu0 0.0
    %179 = vmatpush1.msra.mxu0 %v151
    %180 = vmatprep.subr.mxu0 0.0
    %181 = vmatpush1.msra.mxu0 %v152
    %182 = vmatprep.subr.mxu0 0.0
    %183 = vmatpush1.msra.mxu0 %v153
    %184 = vmatprep.subr.mxu0 0.0
    %185 = vmatpush1.msra.mxu0 %v154
    %186 = vmatprep.subr.mxu0 0.0
    %187 = vmatpush1.msra.mxu0 %v155
    %188 = vmatprep.subr.mxu0 0.0
    %189 = vmatpush1.msra.mxu0 %v156
    %190 = vmatprep.subr.mxu0 0.0
    %191 = vmatpush1.msra.mxu0 %v157
    %192 = vmatprep.subr.mxu0 0.0
    %193 = vmatpush1.msra.mxu0 %v158
    %194 = vmatprep.subr.mxu0 0.0
    %195 = vmatpush1.msra.mxu0 %v159
    %196 = vmatprep.subr.mxu0 0.0
    %197 = vmatpush1.msra.mxu0 %v160
    %198 = vmatprep.subr.mxu0 0.0
    %199 = vmatpush1.msra.mxu0 %v161
    %200 = vmatprep.subr.mxu0 0.0
    %201 = vmatpush1.msra.mxu0 %v162
    %202 = vmatprep.subr.mxu0 0.0
    %203 = vmatpush1.msra.mxu0 0.0
    %204 = vmatprep.subr.mxu0 0.0
    %205 = vmatpush1.msra.mxu0 0.0
    %206 = vmatprep.subr.mxu0 0.0
    %207 = vmatpush1.msra.mxu0 0.0
    %208 = vmatprep.subr.mxu0 0.0
    %209 = vmatpush1.msra.mxu0 0.0
    %210 = vmatprep.subr.mxu0 0.0
    %211 = vmatpush1.msra.mxu0 0.0
    %212 = vmatprep.subr.mxu0 0.0
    %213 = vmatpush1.msra.mxu0 0.0
    %214 = vmatprep.subr.mxu0 0.0
    %215 = vmatpush1.msra.mxu0 0.0
    %216 = vmatprep.subr.mxu0 0.0
    %217 = vmatpush1.msra.mxu0 0.0
    %218 = vmatprep.subr.mxu0 0.0
    %219 = vmatpush1.msra.mxu0 0.0
    %220 = vmatprep.subr.mxu0 0.0
    %221 = vmatpush1.msra.mxu0 0.0
    %222 = vmatprep.subr.mxu0 0.0
    %223 = vmatpush1.msra.mxu0 0.0
    %224 = vmatprep.subr.mxu0 0.0
    %225 = vmatpush1.msra.mxu0 0.0
    %226 = vmatprep.subr.mxu0 0.0
    %227 = vmatpush1.msra.mxu0 0.0
    %228 = vmatprep.subr.mxu0 0.0
    %229 = vmatpush1.msra.mxu0 0.0
    %230 = vmatprep.subr.mxu0 0.0
    %231 = vmatpush1.msra.mxu0 0.0
    %232 = vmatprep.subr.mxu0 0.0
    %233 = vmatpush1.msra.mxu0 0.0
    %234 = vmatprep.mubr.f32.mxu0 0.0
    %235 = vmatmul.mubr.f32.gmra.mrb[0].mxu0 %v146
    %v236 = vpop.f32.mrb[0].mxu0
    %v237 = vadd.f32 %v168, %v236
    %v238 = vpop.f32.mrb[0].mxu0
    %239 = vdwg.mxu0
    %v240 = vmax.f32 %v237, 0.0
    %241 = vst [vmem:[#allocation8] sm:$0xff] %v240
    // Predicated region
    $region34: #{tpu_custom_call.1} parent=1 // pred_check
      _
    $region35: #{tpu_custom_call.1} parent=1 // pred_check_branch
      %243 = sbr.rel (0) target = $region37
    $region36: #{tpu_custom_call.1} parent=1 // pred_region
      %s245 = ssub.s32 128, 128
      %246 = vsyncadd [#allocation4], %s245
      %s248 = sshll.u32 [#allocation8], 4
      %s249 = int_to_ptr.vmem [resolvable:$true] %s248
      %251 = dma.vmem_to_hbm [thread:$0]  %s249, 128, %s5, [#allocation4]
    $region37: #{tpu_custom_call.1} parent=1 // pred_fallthru
      _
    // Predicated region
    $region38: #{tpu_custom_call.1} parent=1 // pred_check
      _
    $region39: #{tpu_custom_call.1} parent=1 // pred_check_branch
      %253 = sbr.rel (0) target = $region41
    $region40: #{tpu_custom_call.1} parent=1 // pred_region
      %254 = dma.done [#allocation4], 128
    $region41: #{tpu_custom_call.1} parent=1 // pred_fallthru
      _
    %255 = vsyncpa [#allocation3], 1
    %256 = vsyncpa [#allocation6], 1
    %257 = vsyncpa [#allocation4], 1

</llo_original>
